<compile_context>
chip_gen: v5e
topology: v5e:2x2
jax: 0.10.0
libtpu: 0.0.40
codegen_flags: <defaults>
</compile_context>

<pallas_src>
import jax
import jax.numpy as jnp
from jax import lax
from jax.experimental import pallas as pl
from jax.experimental.pallas import tpu as pltpu


def _round_up(x, m):
    return ((x + m - 1) // m) * m


def _clustering_kernel(x_ref, wg_ref, wm_ref, g_ref, tx_ref):
    # x_ref:  [TILE_N, D]  input rows
    # wg_ref: [K, D]       gamma Linear weight (PyTorch out_features x in_features)
    # wm_ref: [D, K]       mu Linear weight
    # g_ref:  [TILE_N, K]  softmax responsibilities
    # tx_ref: [TILE_N, D]  reconstruction g @ Wm.T
    x = x_ref[...]

    # logits = x @ Wg.T : contract D of x (axis 1) with D of Wg (axis 1).  MXU.
    logits = lax.dot_general(
        x, wg_ref[...],
        dimension_numbers=(((1,), (1,)), ((), ())),
        preferred_element_type=jnp.float32,
    )  # [TILE_N, K]

    # Numerically-stable softmax over the cluster axis.  Exact divide: the
    # kernel is HBM-bandwidth-bound, so this costs nothing and matches the
    # exact PyTorch softmax (no approx-reciprocal drift).
    m = jnp.max(logits, axis=-1, keepdims=True)
    e = jnp.exp(logits - m)
    denom = jnp.sum(e, axis=-1, keepdims=True)
    g = e / denom

    g_ref[...] = g.astype(g_ref.dtype)

    # tx = g @ Wm.T : contract K of g (axis 1) with K of Wm (axis 1).  MXU.
    tx = lax.dot_general(
        g, wm_ref[...],
        dimension_numbers=(((1,), (1,)), ((), ())),
        preferred_element_type=jnp.float32,
    )  # [TILE_N, D]
    tx_ref[...] = tx.astype(tx_ref.dtype)


def _vmem_capacity_bytes():
    """Per-TensorCore VMEM capacity; conservative fallback if unqueryable."""
    try:
        info = pltpu.get_tpu_info()
        cap = getattr(info, "vmem_capacity_bytes", None)
        if cap:
            return int(cap)
    except Exception:
        pass
    return 64 * (1 << 20)  # v7x-sized conservative fallback (v5e/v6e: 128 MiB)


def _vmem_need_bytes(tile_n, d, k):
    # f32 bytes per grid step: double-buffered x/g/tx row tiles plus
    # (conservatively counted as double-buffered) resident weights.
    return 4 * (2 * tile_n * (2 * d + k) + 2 * 2 * k * d)


def _pick_tile_n(n, d, k, budget_bytes):
    """Largest MXU-friendly row tile (multiple of 128, capped at 2048) that fits
    the VMEM budget; small problems use a single round_up(N, 8) tile."""
    n_up = _round_up(max(n, 1), 8)
    tile = min(2048, n_up)
    if tile >= 256:
        tile = (tile // 128) * 128          # MXU-aligned M tile
    while tile > 128 and _vmem_need_bytes(tile, d, k) > budget_bytes:
        tile -= 128
    while tile > 8 and _vmem_need_bytes(tile, d, k) > budget_bytes:
        tile -= 8                           # last-resort shrink for huge D
    return tile


def _build_call(n, d, k, tile_n, grid_n, dtype, vmem_limit, single_buffer_weights):
    weight_kwargs = {}
    if single_buffer_weights:
        # Constant index_map -> fetched once; buffer_count=1 halves weight VMEM.
        weight_kwargs = dict(pipeline_mode=pl.Buffered(1))
    return pl.pallas_call(
        _clustering_kernel,
        out_shape=(
            jax.ShapeDtypeStruct((n, k), dtype),   # g  (true width, no padding)
            jax.ShapeDtypeStruct((n, d), dtype),   # tx (true width, no padding)
        ),
        grid_spec=pltpu.PrefetchScalarGridSpec(
            num_scalar_prefetch=0,
            grid=(grid_n,),
            in_specs=[
                pl.BlockSpec((tile_n, d), lambda i: (i, 0)),              # x rows
                pl.BlockSpec((k, d), lambda i: (0, 0), **weight_kwargs),  # Wg resident
                pl.BlockSpec((d, k), lambda i: (0, 0), **weight_kwargs),  # Wm resident
            ],
            out_specs=[
                pl.BlockSpec((tile_n, k), lambda i: (i, 0)),              # g
                pl.BlockSpec((tile_n, d), lambda i: (i, 0)),              # tx
            ],
        ),
        compiler_params=pltpu.CompilerParams(
            # Row tiles are independent -> megacore sharding of the row axis.
            dimension_semantics=("parallel",),
            vmem_limit_bytes=vmem_limit,
        ),
    )


def clustering_module_forward(x, w_gamma, w_mu):
    """Pallas-backed equivalent of Clustering_Module.forward.

    Args:
      x:       [N, D] float32 input features.
      w_gamma: [K, D] gamma Linear weight (PyTorch out_features x in_features).
      w_mu:    [D, K] mu Linear weight.
    Returns:
      (x, g, tx, u) matching the PyTorch module.
    """
    N, D = x.shape
    K = w_gamma.shape[0]
    assert w_gamma.shape == (K, D)
    assert w_mu.shape == (D, K)

    capacity = _vmem_capacity_bytes()
    budget = capacity // 2                           # generous pipeline headroom
    tile_n = _pick_tile_n(N, D, K, budget)
    grid_n = pl.cdiv(N, tile_n)                      # ragged last block handled by Pallas

    need = _vmem_need_bytes(tile_n, D, K)
    vmem_limit = int(min(max(2 * need, 32 * (1 << 20)), int(capacity * 0.85)))

    g = tx = None
    # Prefer single-buffered resident weights; fall back to the default
    # double-buffered specs if this JAX build rejects pl.Buffered(1).
    for single_buf in (True, False):
        try:
            g, tx = _build_call(N, D, K, tile_n, grid_n, x.dtype, vmem_limit,
                                single_buf)(x, w_gamma, w_mu)
            break
        except Exception:
            if not single_buf:
                raise

    u = w_mu.T  # cheap API-output transpose only; never fed to the kernel
    return x, g, tx, u


if __name__ == "__main__":
    # Small, deterministic example shapes (module: input_dim=D, num_clusters=K).
    N = 16            # batch of feature vectors
    input_dim = 32    # D
    num_clusters = 8  # K

    key = jax.random.PRNGKey(0)
    kx, kg, km = jax.random.split(key, 3)

    x = jax.random.normal(kx, (N, input_dim), dtype=jnp.float32)
    w_gamma = 0.1 * jax.random.normal(kg, (num_clusters, input_dim), dtype=jnp.float32)
    w_mu = 0.1 * jax.random.normal(km, (input_dim, num_clusters), dtype=jnp.float32)

    x_out, g, tx, u = clustering_module_forward(x, w_gamma, w_mu)
    jax.block_until_ready((x_out, g, tx, u))

    # Pure-JAX reference of the same math (exact softmax, f32 matmuls).
    g_ref = jax.nn.softmax(x @ w_gamma.T, axis=-1)
    tx_ref = g_ref @ w_mu.T
    assert g.shape == (N, num_clusters)
    assert tx.shape == (N, input_dim)
    assert jnp.allclose(g, g_ref, atol=1e-4, rtol=1e-4)
    assert jnp.allclose(tx, tx_ref, atol=1e-4, rtol=1e-4)
    assert jnp.allclose(u, w_mu.T)
    assert x_out.shape == (N, input_dim)

    print("KERNEL_OK")
</pallas_src>

<mosaic_0001>
module attributes {stable_mosaic.version = 11 : i64} {
  func.func @_clustering_kernel(%arg0: i32, %arg1: memref<16x32xf32, #tpu.memory_space<vmem>>, %arg2: memref<8x32xf32, #tpu.memory_space<vmem>>, %arg3: memref<32x8xf32, #tpu.memory_space<vmem>>, %arg4: memref<16x8xf32, #tpu.memory_space<vmem>>, %arg5: memref<16x32xf32, #tpu.memory_space<vmem>>) attributes {dimension_semantics = [#tpu.dimension_semantics<parallel>], iteration_bounds = array<i64: 1>, scalar_prefetch = 0 : i64, scratch_operands = 0 : i64, tpu.core_type = #tpu.core_type<tc>, window_params = [{transform_indices = @transform_0, window_bounds = array<i64: 16, 32>}, {pipeline_mode = #tpu.pipeline_mode<synchronous>, transform_indices = @transform_1, window_bounds = array<i64: 8, 32>}, {pipeline_mode = #tpu.pipeline_mode<synchronous>, transform_indices = @transform_2, window_bounds = array<i64: 32, 8>}, {transform_indices = @transform_3, window_bounds = array<i64: 16, 8>}, {transform_indices = @transform_4, window_bounds = array<i64: 16, 32>}]} {
    %c0 = arith.constant 0 : index
    %c0_0 = arith.constant 0 : index
    %0 = vector.load %arg1[%c0, %c0_0] : memref<16x32xf32, #tpu.memory_space<vmem>>, vector<16x32xf32>
    %c0_1 = arith.constant 0 : index
    %c0_2 = arith.constant 0 : index
    %1 = vector.load %arg2[%c0_1, %c0_2] : memref<8x32xf32, #tpu.memory_space<vmem>>, vector<8x32xf32>
    %cst = arith.constant dense<0.000000e+00> : vector<16x8xf32>
    %2 = tpu.matmul %0, %1, %cst {dimension_numbers = #tpu.dot_dimension_numbers<[1], [1], [0], [0], [0, 0, 1, 0], [], []>} : vector<16x32xf32>, vector<8x32xf32>, vector<16x8xf32> -> vector<16x8xf32>
    %cst_3 = arith.constant dense<0xFF800000> : vector<16xf32>
    %3 = vector.multi_reduction <maximumf>, %2, %cst_3 [1] : vector<16x8xf32> to vector<16xf32>
    %4 = vector.shape_cast %3 : vector<16xf32> to vector<16x1xf32>
    %5 = vector.broadcast %4 : vector<16x1xf32> to vector<16x8xf32>
    %6 = arith.subf %2, %5 : vector<16x8xf32>
    %7 = math.exp %6 : vector<16x8xf32>
    %cst_4 = arith.constant dense<0.000000e+00> : vector<16xf32>
    %8 = vector.multi_reduction <add>, %7, %cst_4 [1] : vector<16x8xf32> to vector<16xf32>
    %9 = vector.shape_cast %8 : vector<16xf32> to vector<16x1xf32>
    %10 = vector.broadcast %9 : vector<16x1xf32> to vector<16x8xf32>
    %11 = arith.divf %7, %10 : vector<16x8xf32>
    %c0_5 = arith.constant 0 : index
    %c0_6 = arith.constant 0 : index
    %12 = vector.load %arg4[%c0_5, %c0_6] : memref<16x8xf32, #tpu.memory_space<vmem>>, vector<16x8xf32>
    tpu.vector_store %arg4[%c0_5, %c0_6], %11 {strides = array<i32>} : memref<16x8xf32, #tpu.memory_space<vmem>>, vector<16x8xf32>,
    %c0_7 = arith.constant 0 : index
    %c0_8 = arith.constant 0 : index
    %13 = vector.load %arg3[%c0_7, %c0_8] : memref<32x8xf32, #tpu.memory_space<vmem>>, vector<32x8xf32>
    %cst_9 = arith.constant dense<0.000000e+00> : vector<16x32xf32>
    %14 = tpu.matmul %11, %13, %cst_9 {dimension_numbers = #tpu.dot_dimension_numbers<[1], [1], [0], [0], [0, 0, 1, 0], [], []>} : vector<16x8xf32>, vector<32x8xf32>, vector<16x32xf32> -> vector<16x32xf32>
    %c0_10 = arith.constant 0 : index
    %c0_11 = arith.constant 0 : index
    %15 = vector.load %arg5[%c0_10, %c0_11] : memref<16x32xf32, #tpu.memory_space<vmem>>, vector<16x32xf32>
    tpu.vector_store %arg5[%c0_10, %c0_11], %14 {strides = array<i32>} : memref<16x32xf32, #tpu.memory_space<vmem>>, vector<16x32xf32>,
    return
  }
  func.func @transform_0(%arg0: i32) -> (i32, i32) {
    %c0_i32 = arith.constant 0 : i32
    %c0_i32_0 = arith.constant 0 : i32
    return %arg0, %c0_i32 : i32, i32
  }
  func.func @transform_1(%arg0: i32) -> (i32, i32) {
    %c0_i32 = arith.constant 0 : i32
    %c0_i32_0 = arith.constant 0 : i32
    %c0_i32_1 = arith.constant 0 : i32
    return %c0_i32, %c0_i32_0 : i32, i32
  }
  func.func @transform_2(%arg0: i32) -> (i32, i32) {
    %c0_i32 = arith.constant 0 : i32
    %c0_i32_0 = arith.constant 0 : i32
    %c0_i32_1 = arith.constant 0 : i32
    return %c0_i32, %c0_i32_0 : i32, i32
  }
  func.func @transform_3(%arg0: i32) -> (i32, i32) {
    %c0_i32 = arith.constant 0 : i32
    %c0_i32_0 = arith.constant 0 : i32
    return %arg0, %c0_i32 : i32, i32
  }
  func.func @transform_4(%arg0: i32) -> (i32, i32) {
    %c0_i32 = arith.constant 0 : i32
    %c0_i32_0 = arith.constant 0 : i32
    return %arg0, %c0_i32 : i32, i32
  }
}

module attributes {stable_mosaic.version = 11 : i64} {
  func.func @_clustering_kernel(%arg0: i32, %arg1: memref<16x32xf32, #tpu.memory_space<vmem>>, %arg2: memref<8x32xf32, #tpu.memory_space<vmem>>, %arg3: memref<32x8xf32, #tpu.memory_space<vmem>>, %arg4: memref<16x8xf32, #tpu.memory_space<vmem>>, %arg5: memref<16x32xf32, #tpu.memory_space<vmem>>) attributes {dimension_semantics = [#tpu.dimension_semantics<parallel>], iteration_bounds = array<i64: 1>, scalar_prefetch = 0 : i64, scratch_operands = 0 : i64, tpu.core_type = #tpu.core_type<tc>, window_params = [{transform_indices = @transform_0, window_bounds = array<i64: 16, 32>}, {pipeline_mode = #tpu.pipeline_mode<synchronous>, transform_indices = @transform_1, window_bounds = array<i64: 8, 32>}, {pipeline_mode = #tpu.pipeline_mode<synchronous>, transform_indices = @transform_2, window_bounds = array<i64: 32, 8>}, {transform_indices = @transform_3, window_bounds = array<i64: 16, 8>}, {transform_indices = @transform_4, window_bounds = array<i64: 16, 32>}]} {
    %c0 = arith.constant 0 : index
    %c0_0 = arith.constant 0 : index
    %0 = vector.load %arg1[%c0, %c0_0] : memref<16x32xf32, #tpu.memory_space<vmem>>, vector<16x32xf32>
    %c0_1 = arith.constant 0 : index
    %c0_2 = arith.constant 0 : index
    %1 = vector.load %arg2[%c0_1, %c0_2] : memref<8x32xf32, #tpu.memory_space<vmem>>, vector<8x32xf32>
    %cst = arith.constant dense<0.000000e+00> : vector<16x8xf32>
    %2 = tpu.matmul %0, %1, %cst {dimension_numbers = #tpu.dot_dimension_numbers<[1], [1], [0], [0], [0, 0, 1, 0], [], []>} : vector<16x32xf32>, vector<8x32xf32>, vector<16x8xf32> -> vector<16x8xf32>
    %cst_3 = arith.constant dense<0xFF800000> : vector<16xf32>
    %3 = vector.multi_reduction <maximumf>, %2, %cst_3 [1] : vector<16x8xf32> to vector<16xf32>
    %4 = vector.shape_cast %3 : vector<16xf32> to vector<16x1xf32>
    %5 = vector.broadcast %4 : vector<16x1xf32> to vector<16x8xf32>
    %6 = arith.subf %2, %5 : vector<16x8xf32>
    %7 = math.exp %6 : vector<16x8xf32>
    %cst_4 = arith.constant dense<0.000000e+00> : vector<16xf32>
    %8 = vector.multi_reduction <add>, %7, %cst_4 [1] : vector<16x8xf32> to vector<16xf32>
    %9 = vector.shape_cast %8 : vector<16xf32> to vector<16x1xf32>
    %10 = vector.broadcast %9 : vector<16x1xf32> to vector<16x8xf32>
    %11 = arith.divf %7, %10 : vector<16x8xf32>
    %c0_5 = arith.constant 0 : index
    %c0_6 = arith.constant 0 : index
    %12 = vector.load %arg4[%c0_5, %c0_6] : memref<16x8xf32, #tpu.memory_space<vmem>>, vector<16x8xf32>
    tpu.vector_store %arg4[%c0_5, %c0_6], %11 {strides = array<i32>} : memref<16x8xf32, #tpu.memory_space<vmem>>, vector<16x8xf32>,
    %c0_7 = arith.constant 0 : index
    %c0_8 = arith.constant 0 : index
    %13 = vector.load %arg3[%c0_7, %c0_8] : memref<32x8xf32, #tpu.memory_space<vmem>>, vector<32x8xf32>
    %cst_9 = arith.constant dense<0.000000e+00> : vector<16x32xf32>
    %14 = tpu.matmul %11, %13, %cst_9 {dimension_numbers = #tpu.dot_dimension_numbers<[1], [1], [0], [0], [0, 0, 1, 0], [], []>} : vector<16x8xf32>, vector<32x8xf32>, vector<16x32xf32> -> vector<16x32xf32>
    %c0_10 = arith.constant 0 : index
    %c0_11 = arith.constant 0 : index
    %15 = vector.load %arg5[%c0_10, %c0_11] : memref<16x32xf32, #tpu.memory_space<vmem>>, vector<16x32xf32>
    tpu.vector_store %arg5[%c0_10, %c0_11], %14 {strides = array<i32>} : memref<16x32xf32, #tpu.memory_space<vmem>>, vector<16x32xf32>,
    return
  }
  func.func @transform_0(%arg0: i32) -> (i32, i32) {
    %c0_i32 = arith.constant 0 : i32
    %c0_i32_0 = arith.constant 0 : i32
    return %arg0, %c0_i32 : i32, i32
  }
  func.func @transform_1(%arg0: i32) -> (i32, i32) {
    %c0_i32 = arith.constant 0 : i32
    %c0_i32_0 = arith.constant 0 : i32
    %c0_i32_1 = arith.constant 0 : i32
    return %c0_i32, %c0_i32_0 : i32, i32
  }
  func.func @transform_2(%arg0: i32) -> (i32, i32) {
    %c0_i32 = arith.constant 0 : i32
    %c0_i32_0 = arith.constant 0 : i32
    %c0_i32_1 = arith.constant 0 : i32
    return %c0_i32, %c0_i32_0 : i32, i32
  }
  func.func @transform_3(%arg0: i32) -> (i32, i32) {
    %c0_i32 = arith.constant 0 : i32
    %c0_i32_0 = arith.constant 0 : i32
    return %arg0, %c0_i32 : i32, i32
  }
  func.func @transform_4(%arg0: i32) -> (i32, i32) {
    %c0_i32 = arith.constant 0 : i32
    %c0_i32_0 = arith.constant 0 : i32
    return %arg0, %c0_i32 : i32, i32
  }
}

</mosaic_0001>

<llo_original>
// kernel: tpu_custom_call.1
$region0: #{tpu_custom_call.1}
  #allocation0 [shape = 'u32[]', space=smem, size = 0x4, offset = 0x4, fixed_abs, tag = 'smem constant byte address 0x4 - core index']
  #allocation1 [shape = 'u32[72,128]{1,0:T(1,128)}', space=vmem, size = 0x9000, scoped, tag = 'internal scratch']
  %s0 = inlined_call_operand.vmem [shape: f32[16,32], index: 0, kind: input, shape index: {}]
  %s1 = inlined_call_operand.vmem [shape: f32[8,32], index: 1, kind: input, shape index: {}]
  %s2 = inlined_call_operand.vmem [shape: f32[32,8], index: 2, kind: input, shape index: {}]
  %s3 = inlined_call_operand.vmem [shape: f32[16,8], index: 3, kind: output, shape index: {0}]
  %s4 = inlined_call_operand.hbm [shape: f32[16,32], index: 4, kind: output, shape index: {1}]
  %5 = xla_tuple %s3, %s4
  %s6 = sld [smem:[#allocation0]]
  $region30: #{tpu_custom_call.1} parent=0
    _
  %s8 = ssub.s32 1, %s6
  %s9 = scalar_select 0, %s8, %s6
  $region1: #{tpu_custom_call.1} parent=0
    #allocation2 [shape = 'u8[8192]{0}', space=vmem, size = 0x2000, scoped, tag = 'output window, operand 1, single buffered']
    #allocation3 [shape = 's32[1]{0}', space=sflag, size = 0x4, scoped, tag = 'scoped memory for tpu_custom_call.1']
    %10 = vsyncpa [#allocation3], 0
    // Predicated region
    $region2: #{tpu_custom_call.1} parent=1 // pred_check
      _
    $region3: #{tpu_custom_call.1} parent=1 // pred_check_branch
      %12 = sbr.rel (0) target = $region5
    $region4: #{tpu_custom_call.1} parent=1 // pred_region
      _
    $region5: #{tpu_custom_call.1} parent=1 // pred_fallthru
      _
    // Predicated region
    $region6: #{tpu_custom_call.1} parent=1 // pred_check
      _
    $region7: #{tpu_custom_call.1} parent=1 // pred_check_branch
      %14 = sbr.rel (0) target = $region9
    $region8: #{tpu_custom_call.1} parent=1 // pred_region
      _
    $region9: #{tpu_custom_call.1} parent=1 // pred_fallthru
      _
    // Predicated region
    $region10: #{tpu_custom_call.1} parent=1 // pred_check
      _
    $region11: #{tpu_custom_call.1} parent=1 // pred_check_branch
      %16 = sbr.rel (0) target = $region13
    $region12: #{tpu_custom_call.1} parent=1 // pred_region
      _
    $region13: #{tpu_custom_call.1} parent=1 // pred_fallthru
      _
    %v17 = vld [vmem:[%s0] sm:$0xff]
    %v18 = vld [vmem:[%s0 + $0x8] sm:$0xff]
    %v19 = vld [vmem:[%s1] sm:$0xff]
    %vm20 = vcmask 261120
    %v22 = vsel %vm20, %v17, 0
    %v25 = vsel %vm20, %v18, 0
    %v28 = vsel %vm20, %v19, 0
    %30 = vmatpush.xpose.msra.mxu0 0.0
    %31 = vmatpush.xpose.msra.mxu0 0.0
    %32 = vmatpush.xpose.msra.mxu0 0.0
    %33 = vmatpush.xpose.msra.mxu0 0.0
    %34 = vmatpush.xpose.msra.mxu0 0.0
    %35 = vmatpush.xpose.msra.mxu0 0.0
    %36 = vmatpush.xpose.msra.mxu0 0.0
    %37 = vmatpush.xpose.msra.mxu0 0.0
    %38 = vmatpush.xpose.msra.mxu0 0.0
    %39 = vmatpush.xpose.msra.mxu0 0.0
    %40 = vmatpush.xpose.msra.mxu0 0.0
    %41 = vmatpush.xpose.msra.mxu0 0.0
    %42 = vmatpush.xpose.msra.mxu0 0.0
    %43 = vmatpush.xpose.msra.mxu0 0.0
    %44 = vmatpush.xpose.msra.mxu0 0.0
    %45 = vmatpush.xpose.msra.mxu0 %v28
    %46 = vmatmul.f32.gmra.mxu0 %v22
    %v47 = vpop.f32.mrf.mxu0
    %v48 = vadd.f32 0.0, %v47
    %49 = vmatmul.f32.gmra.mxu0 %v25
    %v50 = vpop.f32.mrf.mxu0
    %v51 = vadd.f32 0.0, %v50
    %52 = vdwg.mxu0
    %vm53 = vcmask 64512
    %v54 = vsel %vm53, %v48, -inf
    %55 = vmax.xlane.f32.xlu0 %v54
    %v56 = vpop.xlane.xlu0 %55
    %v57 = vsel %vm53, %v51, -inf
    %58 = vmax.xlane.f32.xlu0 %v57
    %v59 = vpop.xlane.xlu0 %58
    %v60 = vsub.f32 %v48, %v56
    %v61 = vsub.f32 %v51, %v59
    %v62 = vmul.f32 %v60, 1.442695
    %v63 = vpow.pop %v62
    %v64 = vmul.f32 %v61, 1.442695
    %v65 = vpow.pop %v64
    %v66 = vsel %vm53, %v63, 0.0
    %67 = vadd.xlane.f32.xlu0 %v66
    %v68 = vpop.xlane.xlu0 %67
    %v69 = vsel %vm53, %v65, 0.0
    %70 = vadd.xlane.f32.xlu0 %v69
    %v71 = vpop.xlane.xlu0 %70
    %v72 = vrcp.pop %v68
    %v73 = vmul.f32 %v68, %v72
    %v74 = vsub.f32 1.0, %v73
    %v75 = vmul.f32 %v72, %v74
    %v76 = vadd.f32 %v72, %v75
    %vm77 = vweird.f32 %v68
    %vm78 = vweird.f32 %v72
    %vm79 = vmor %vm77, %vm78
    %v80 = vsel %vm79, %v72, %v76
    %v81 = vand.u32 2147483647, %v68
    %vm82 = vcmp.eq.f32.partialorder %v81, 8.507059e+37
    %v83 = vand.u32 %v68, 2147483648
    %v84 = vor.u32 1.1754944e-38, %v83
    %v85 = vsel %vm82, %v84, %v80
    %v86 = vmul.f32 %v63, %v85
    %v87 = vrcp.pop %v71
    %v88 = vmul.f32 %v71, %v87
    %v89 = vsub.f32 1.0, %v88
    %v90 = vmul.f32 %v87, %v89
    %v91 = vadd.f32 %v87, %v90
    %vm92 = vweird.f32 %v71
    %vm93 = vweird.f32 %v87
    %vm94 = vmor %vm92, %vm93
    %v95 = vsel %vm94, %v87, %v91
    %v96 = vand.u32 2147483647, %v71
    %vm97 = vcmp.eq.f32.partialorder %v96, 8.507059e+37
    %v98 = vand.u32 %v71, 2147483648
    %v99 = vor.u32 1.1754944e-38, %v98
    %v100 = vsel %vm97, %v99, %v95
    %v101 = vmul.f32 %v65, %v100
    %102 = vst.msk [vmem:[%s3] sm:$0xff] %vm53, %v86
    %103 = vst.msk [vmem:[%s3 + $0x8] sm:$0xff] %vm53, %v101
    %v104 = vld [vmem:[%s2] sm:$0xff]
    %v105 = vld [vmem:[%s2 + $0x8] sm:$0xff]
    %v106 = vld [vmem:[%s2 + $0x10] sm:$0xff]
    %v107 = vld [vmem:[%s2 + $0x18] sm:$0xff]
    %v109 = vsel %vm53, %v86, 0
    %v112 = vsel %vm53, %v101, 0
    %v115 = vsel %vm53, %v104, 0
    %v118 = vsel %vm53, %v105, 0
    %v121 = vsel %vm53, %v106, 0
    %v124 = vsel %vm53, %v107, 0
    %126 = vmatpush.xpose.msra.mxu0 0.0
    %127 = vmatpush.xpose.msra.mxu0 0.0
    %128 = vmatpush.xpose.msra.mxu0 0.0
    %129 = vmatpush.xpose.msra.mxu0 0.0
    %130 = vmatpush.xpose.msra.mxu0 0.0
    %131 = vmatpush.xpose.msra.mxu0 0.0
    %132 = vmatpush.xpose.msra.mxu0 0.0
    %133 = vmatpush.xpose.msra.mxu0 0.0
    %134 = vmatpush.xpose.msra.mxu0 0.0
    %135 = vmatpush.xpose.msra.mxu0 0.0
    %136 = vmatpush.xpose.msra.mxu0 0.0
    %137 = vmatpush.xpose.msra.mxu0 0.0
    %138 = vmatpush.xpose.msra.mxu0 %v124
    %139 = vmatpush.xpose.msra.mxu0 %v121
    %140 = vmatpush.xpose.msra.mxu0 %v118
    %141 = vmatpush.xpose.msra.mxu0 %v115
    %142 = vmatmul.f32.gmra.mxu0 %v109
    %v143 = vpop.f32.mrf.mxu0
    %v144 = vadd.f32 0.0, %v143
    %145 = vmatmul.f32.gmra.mxu0 %v112
    %v146 = vpop.f32.mrf.mxu0
    %v147 = vadd.f32 0.0, %v146
    %148 = vdwg.mxu0
    %149 = vst.msk [vmem:[#allocation2] sm:$0xff] %vm20, %v144
    %150 = vst.msk [vmem:[#allocation2 + $0x8] sm:$0xff] %vm20, %v147
    // Predicated region
    $region14: #{tpu_custom_call.1} parent=1 // pred_check
      _
    $region15: #{tpu_custom_call.1} parent=1 // pred_check_branch
      %152 = sbr.rel (0) target = $region17
    $region16: #{tpu_custom_call.1} parent=1 // pred_region
      _
    $region17: #{tpu_custom_call.1} parent=1 // pred_fallthru
      _
    // Predicated region
    $region18: #{tpu_custom_call.1} parent=1 // pred_check
      _
    $region19: #{tpu_custom_call.1} parent=1 // pred_check_branch
      %154 = sbr.rel (0) target = $region21
    $region20: #{tpu_custom_call.1} parent=1 // pred_region
      %156 = vsyncadd [#allocation3], 0
      %s157 = sshll.u32 [#allocation2], 4
      %s158 = int_to_ptr.vmem [resolvable:$true] %s157
      %s159 = sshll.u32 %s4, 4
      %s160 = int_to_ptr.hbm [resolvable:$true] %s159
      %165 = dma.vmem_to_hbm [thread:$0]  %s158, 256, %s160, [#allocation3], 128, 128, 8
    $region21: #{tpu_custom_call.1} parent=1 // pred_fallthru
      _
    // Predicated region
    $region22: #{tpu_custom_call.1} parent=1 // pred_check
      _
    $region23: #{tpu_custom_call.1} parent=1 // pred_check_branch
      %167 = sbr.rel (0) target = $region25
    $region24: #{tpu_custom_call.1} parent=1 // pred_region
      _
    $region25: #{tpu_custom_call.1} parent=1 // pred_fallthru
      _
    // Predicated region
    $region26: #{tpu_custom_call.1} parent=1 // pred_check
      _
    $region27: #{tpu_custom_call.1} parent=1 // pred_check_branch
      %169 = sbr.rel (0) target = $region29
    $region28: #{tpu_custom_call.1} parent=1 // pred_region
      %171 = dma.done [#allocation3], 256
    $region29: #{tpu_custom_call.1} parent=1 // pred_fallthru
      _
    %172 = vsyncpa [#allocation3], 1

// kernel: tpu_custom_call.1
$region0: #{tpu_custom_call.1}
  #allocation0 [shape = 'u32[]', space=smem, size = 0x4, offset = 0x4, fixed_abs, tag = 'smem constant byte address 0x4 - core index']
  #allocation1 [shape = 'u32[72,128]{1,0:T(1,128)}', space=vmem, size = 0x9000, scoped, tag = 'internal scratch']
  %s0 = inlined_call_operand.vmem [shape: f32[16,32], index: 0, kind: input, shape index: {}]
  %s1 = inlined_call_operand.vmem [shape: f32[8,32], index: 1, kind: input, shape index: {}]
  %s2 = inlined_call_operand.vmem [shape: f32[32,8], index: 2, kind: input, shape index: {}]
  %s3 = inlined_call_operand.vmem [shape: f32[16,8], index: 3, kind: output, shape index: {0}]
  %s4 = inlined_call_operand.hbm [shape: f32[16,32], index: 4, kind: output, shape index: {1}]
  %5 = xla_tuple %s3, %s4
  %s6 = sld [smem:[#allocation0]]
  $region30: #{tpu_custom_call.1} parent=0
    _
  %s8 = ssub.s32 1, %s6
  %s9 = scalar_select 0, %s8, %s6
  $region1: #{tpu_custom_call.1} parent=0
    #allocation2 [shape = 'u8[8192]{0}', space=vmem, size = 0x2000, scoped, tag = 'output window, operand 1, single buffered']
    #allocation3 [shape = 's32[1]{0}', space=sflag, size = 0x4, scoped, tag = 'scoped memory for tpu_custom_call.1']
    %10 = vsyncpa [#allocation3], 0
    // Predicated region
    $region2: #{tpu_custom_call.1} parent=1 // pred_check
      _
    $region3: #{tpu_custom_call.1} parent=1 // pred_check_branch
      %12 = sbr.rel (0) target = $region5
    $region4: #{tpu_custom_call.1} parent=1 // pred_region
      _
    $region5: #{tpu_custom_call.1} parent=1 // pred_fallthru
      _
    // Predicated region
    $region6: #{tpu_custom_call.1} parent=1 // pred_check
      _
    $region7: #{tpu_custom_call.1} parent=1 // pred_check_branch
      %14 = sbr.rel (0) target = $region9
    $region8: #{tpu_custom_call.1} parent=1 // pred_region
      _
    $region9: #{tpu_custom_call.1} parent=1 // pred_fallthru
      _
    // Predicated region
    $region10: #{tpu_custom_call.1} parent=1 // pred_check
      _
    $region11: #{tpu_custom_call.1} parent=1 // pred_check_branch
      %16 = sbr.rel (0) target = $region13
    $region12: #{tpu_custom_call.1} parent=1 // pred_region
      _
    $region13: #{tpu_custom_call.1} parent=1 // pred_fallthru
      _
    %v17 = vld [vmem:[%s0] sm:$0xff]
    %v18 = vld [vmem:[%s0 + $0x8] sm:$0xff]
    %v19 = vld [vmem:[%s1] sm:$0xff]
    %vm20 = vcmask 261120
    %v22 = vsel %vm20, %v17, 0
    %v25 = vsel %vm20, %v18, 0
    %v28 = vsel %vm20, %v19, 0
    %30 = vmatpush.xpose.msra.mxu0 0.0
    %31 = vmatpush.xpose.msra.mxu0 0.0
    %32 = vmatpush.xpose.msra.mxu0 0.0
    %33 = vmatpush.xpose.msra.mxu0 0.0
    %34 = vmatpush.xpose.msra.mxu0 0.0
    %35 = vmatpush.xpose.msra.mxu0 0.0
    %36 = vmatpush.xpose.msra.mxu0 0.0
    %37 = vmatpush.xpose.msra.mxu0 0.0
    %38 = vmatpush.xpose.msra.mxu0 0.0
    %39 = vmatpush.xpose.msra.mxu0 0.0
    %40 = vmatpush.xpose.msra.mxu0 0.0
    %41 = vmatpush.xpose.msra.mxu0 0.0
    %42 = vmatpush.xpose.msra.mxu0 0.0
    %43 = vmatpush.xpose.msra.mxu0 0.0
    %44 = vmatpush.xpose.msra.mxu0 0.0
    %45 = vmatpush.xpose.msra.mxu0 %v28
    %46 = vmatmul.f32.gmra.mxu0 %v22
    %v47 = vpop.f32.mrf.mxu0
    %v48 = vadd.f32 0.0, %v47
    %49 = vmatmul.f32.gmra.mxu0 %v25
    %v50 = vpop.f32.mrf.mxu0
    %v51 = vadd.f32 0.0, %v50
    %52 = vdwg.mxu0
    %vm53 = vcmask 64512
    %v54 = vsel %vm53, %v48, -inf
    %55 = vmax.xlane.f32.xlu0 %v54
    %v56 = vpop.xlane.xlu0 %55
    %v57 = vsel %vm53, %v51, -inf
    %58 = vmax.xlane.f32.xlu0 %v57
    %v59 = vpop.xlane.xlu0 %58
    %v60 = vsub.f32 %v48, %v56
    %v61 = vsub.f32 %v51, %v59
    %v62 = vmul.f32 %v60, 1.442695
    %v63 = vpow.pop %v62
    %v64 = vmul.f32 %v61, 1.442695
    %v65 = vpow.pop %v64
    %v66 = vsel %vm53, %v63, 0.0
    %67 = vadd.xlane.f32.xlu0 %v66
    %v68 = vpop.xlane.xlu0 %67
    %v69 = vsel %vm53, %v65, 0.0
    %70 = vadd.xlane.f32.xlu0 %v69
    %v71 = vpop.xlane.xlu0 %70
    %v72 = vrcp.pop %v68
    %v73 = vmul.f32 %v68, %v72
    %v74 = vsub.f32 1.0, %v73
    %v75 = vmul.f32 %v72, %v74
    %v76 = vadd.f32 %v72, %v75
    %vm77 = vweird.f32 %v68
    %vm78 = vweird.f32 %v72
    %vm79 = vmor %vm77, %vm78
    %v80 = vsel %vm79, %v72, %v76
    %v81 = vand.u32 2147483647, %v68
    %vm82 = vcmp.eq.f32.partialorder %v81, 8.507059e+37
    %v83 = vand.u32 %v68, 2147483648
    %v84 = vor.u32 1.1754944e-38, %v83
    %v85 = vsel %vm82, %v84, %v80
    %v86 = vmul.f32 %v63, %v85
    %v87 = vrcp.pop %v71
    %v88 = vmul.f32 %v71, %v87
    %v89 = vsub.f32 1.0, %v88
    %v90 = vmul.f32 %v87, %v89
    %v91 = vadd.f32 %v87, %v90
    %vm92 = vweird.f32 %v71
    %vm93 = vweird.f32 %v87
    %vm94 = vmor %vm92, %vm93
    %v95 = vsel %vm94, %v87, %v91
    %v96 = vand.u32 2147483647, %v71
    %vm97 = vcmp.eq.f32.partialorder %v96, 8.507059e+37
    %v98 = vand.u32 %v71, 2147483648
    %v99 = vor.u32 1.1754944e-38, %v98
    %v100 = vsel %vm97, %v99, %v95
    %v101 = vmul.f32 %v65, %v100
    %102 = vst.msk [vmem:[%s3] sm:$0xff] %vm53, %v86
    %103 = vst.msk [vmem:[%s3 + $0x8] sm:$0xff] %vm53, %v101
    %v104 = vld [vmem:[%s2] sm:$0xff]
    %v105 = vld [vmem:[%s2 + $0x8] sm:$0xff]
    %v106 = vld [vmem:[%s2 + $0x10] sm:$0xff]
    %v107 = vld [vmem:[%s2 + $0x18] sm:$0xff]
    %v109 = vsel %vm53, %v86, 0
    %v112 = vsel %vm53, %v101, 0
    %v115 = vsel %vm53, %v104, 0
    %v118 = vsel %vm53, %v105, 0
    %v121 = vsel %vm53, %v106, 0
    %v124 = vsel %vm53, %v107, 0
    %126 = vmatpush.xpose.msra.mxu0 0.0
    %127 = vmatpush.xpose.msra.mxu0 0.0
    %128 = vmatpush.xpose.msra.mxu0 0.0
    %129 = vmatpush.xpose.msra.mxu0 0.0
    %130 = vmatpush.xpose.msra.mxu0 0.0
    %131 = vmatpush.xpose.msra.mxu0 0.0
    %132 = vmatpush.xpose.msra.mxu0 0.0
    %133 = vmatpush.xpose.msra.mxu0 0.0
    %134 = vmatpush.xpose.msra.mxu0 0.0
    %135 = vmatpush.xpose.msra.mxu0 0.0
    %136 = vmatpush.xpose.msra.mxu0 0.0
    %137 = vmatpush.xpose.msra.mxu0 0.0
    %138 = vmatpush.xpose.msra.mxu0 %v124
    %139 = vmatpush.xpose.msra.mxu0 %v121
    %140 = vmatpush.xpose.msra.mxu0 %v118
    %141 = vmatpush.xpose.msra.mxu0 %v115
    %142 = vmatmul.f32.gmra.mxu0 %v109
    %v143 = vpop.f32.mrf.mxu0
    %v144 = vadd.f32 0.0, %v143
    %145 = vmatmul.f32.gmra.mxu0 %v112
    %v146 = vpop.f32.mrf.mxu0
    %v147 = vadd.f32 0.0, %v146
    %148 = vdwg.mxu0
    %149 = vst.msk [vmem:[#allocation2] sm:$0xff] %vm20, %v144
    %150 = vst.msk [vmem:[#allocation2 + $0x8] sm:$0xff] %vm20, %v147
    // Predicated region
    $region14: #{tpu_custom_call.1} parent=1 // pred_check
      _
    $region15: #{tpu_custom_call.1} parent=1 // pred_check_branch
      %152 = sbr.rel (0) target = $region17
    $region16: #{tpu_custom_call.1} parent=1 // pred_region
      _
    $region17: #{tpu_custom_call.1} parent=1 // pred_fallthru
      _
    // Predicated region
    $region18: #{tpu_custom_call.1} parent=1 // pred_check
      _
    $region19: #{tpu_custom_call.1} parent=1 // pred_check_branch
      %154 = sbr.rel (0) target = $region21
    $region20: #{tpu_custom_call.1} parent=1 // pred_region
      %156 = vsyncadd [#allocation3], 0
      %s157 = sshll.u32 [#allocation2], 4
      %s158 = int_to_ptr.vmem [resolvable:$true] %s157
      %s159 = sshll.u32 %s4, 4
      %s160 = int_to_ptr.hbm [resolvable:$true] %s159
      %165 = dma.vmem_to_hbm [thread:$0]  %s158, 256, %s160, [#allocation3], 128, 128, 8
    $region21: #{tpu_custom_call.1} parent=1 // pred_fallthru
      _
    // Predicated region
    $region22: #{tpu_custom_call.1} parent=1 // pred_check
      _
    $region23: #{tpu_custom_call.1} parent=1 // pred_check_branch
      %167 = sbr.rel (0) target = $region25
    $region24: #{tpu_custom_call.1} parent=1 // pred_region
      _
    $region25: #{tpu_custom_call.1} parent=1 // pred_fallthru
      _
    // Predicated region
    $region26: #{tpu_custom_call.1} parent=1 // pred_check
      _
    $region27: #{tpu_custom_call.1} parent=1 // pred_check_branch
      %169 = sbr.rel (0) target = $region29
    $region28: #{tpu_custom_call.1} parent=1 // pred_region
      %171 = dma.done [#allocation3], 256
    $region29: #{tpu_custom_call.1} parent=1 // pred_fallthru
      _
    %172 = vsyncpa [#allocation3], 1

</llo_original>
